<compile_context>
chip_gen: v6e
topology: v6e:2x2x1
jax: 0.10.0
libtpu: 0.0.40
codegen_flags: <defaults>
</compile_context>

<pallas_src>
import numpy as np
import jax
import jax.numpy as jnp
from jax.experimental import pallas as pl
from jax.experimental.pallas import tpu as pltpu

LANE = 128
SUBLANE = 8


# ----------------------------------------------------------------------------
# Glue: replicate the PyTorch __init__ constants (deterministic, in-script).
# ----------------------------------------------------------------------------
def extend_axis(axis):
    ext_size = len(axis)
    start, end = axis[0], axis[-1]
    step = (end - start) / (len(axis) - 1)
    left = np.array([axis[0] - step * i for i in range(1, 1 + ext_size // 2)])[::-1]
    right = np.array([axis[-1] + step * i for i in range(1, 1 + ext_size // 2)])
    return np.concatenate([left, axis, right])


def gen_flex_points(img_h, img_w):
    x_axis = extend_axis(np.linspace(-1.0, 1.0, img_w))
    y_axis = extend_axis(np.linspace(-1.0, 1.0, img_h))
    grid_X, grid_Y = np.meshgrid(x_axis, y_axis)
    return grid_X.astype(np.float32), grid_Y.astype(np.float32)


def compute_L_inverse(PX, PY, reg_factor=0.0):
    # PX, PY: (N, 1) float32
    N = PX.shape[0]
    Xmat = np.tile(PX, (1, N))
    Ymat = np.tile(PY, (1, N))
    d2 = (Xmat - Xmat.T) ** 2 + (Ymat - Ymat.T) ** 2
    d2[d2 == 0] = 1.0
    K = d2 * np.log(d2)
    if reg_factor != 0:
        K = K + np.eye(N) * reg_factor
    O = np.ones((N, 1), dtype=np.float64)
    Z = np.zeros((3, 3), dtype=np.float64)
    P = np.concatenate([O, PX.astype(np.float64), PY.astype(np.float64)], axis=1)
    L = np.block([[K, P], [P.T, Z]])
    # TODO(synk): torch.inverse has no Pallas equivalent; 12x12 inverse stays in host glue.
    return np.linalg.inv(L).astype(np.float32)      # (N+3, N+3)


# ----------------------------------------------------------------------------
# Pallas-backed module.
# ----------------------------------------------------------------------------
class StitchingTpsGridGenPallas:
    def __init__(self, img_h=16, img_w=16, reg_factor=0.0):
        gX, gY = gen_flex_points(img_h, img_w)          # (H_ext, W_ext) each, f32
        self.H, self.W = gX.shape
        self.grid_X_np = gX
        self.grid_Y_np = gY

        grid_size = 3
        axis_coords = np.linspace(-1.0, 1.0, grid_size)
        self.N = grid_size * grid_size
        P_Y, P_X = np.meshgrid(axis_coords, axis_coords)
        PX = np.reshape(P_X, (-1, 1)).astype(np.float32)
        PY = np.reshape(P_Y, (-1, 1)).astype(np.float32)
        self.PX = PX[:, 0]                              # (N,)
        self.PY = PY[:, 0]

        Li = compute_L_inverse(PX, PY, reg_factor)      # (N+3, N+3)
        self.Li = Li
        self.Li_left = jnp.asarray(Li[:, :self.N])      # (N+3, N)

        # --- lane-dense pixel layout -------------------------------------
        npix = self.H * self.W
        rows = -(-npix // LANE)                          # ceil(npix / 128)
        rows8 = -(-rows // SUBLANE) * SUBLANE            # multiple of 8 sublanes
        self.rt = min(256, rows8)                        # pixel-tile rows (x128 lanes)
        self.Rtot = -(-rows8 // self.rt) * self.rt       # rows padded to a tile multiple
        self.npad = self.Rtot * LANE
        self.npix = npix

        # --- precompute batch-invariant basis table Phi (N+3, Rtot, 128) --
        # rows 0..N-1: U_k = d2*log(d2);  row N: 1;  row N+1: x;  row N+2: y
        gx = np.zeros(self.npad, np.float32)
        gy = np.zeros(self.npad, np.float32)
        gx[:npix] = gX.reshape(-1)
        gy[:npix] = gY.reshape(-1)
        dx = gx[None, :] - self.PX[:, None]
        dy = gy[None, :] - self.PY[:, None]
        d2 = dx * dx + dy * dy
        d2 = np.where(d2 == 0.0, np.float32(1.0), d2)    # same guard as torch
        U = d2 * np.log(d2)                              # (N, npad) f32
        phi = np.concatenate(
            [U, np.ones((1, self.npad), np.float32), gx[None, :], gy[None, :]],
            axis=0).astype(np.float32)                   # (N+3, npad)
        self.phi = jnp.asarray(phi.reshape(self.N + 3, self.Rtot, LANE))

        self._forward = self._build_forward()

    def _build_forward(self):
        N = self.N
        ncoef = N + 3
        rt = self.rt
        Rtot = self.Rtot
        H, W = self.H, self.W
        phi = self.phi
        li_left = self.Li_left

        def kernel(wa_ref, phi_ref, out_ref):
            # wa_ref : SMEM (B, 2*(N+3)) f32 scalars
            # phi_ref: VMEM (N+3, rt, 128) lane-dense basis tile
            # out_ref: VMEM (1, 2, rt, 128)
            b = pl.program_id(1)
            for c in range(2):                            # 0 = X', 1 = Y'
                acc = wa_ref[b, c * ncoef] * phi_ref[0]
                for j in range(1, ncoef):
                    acc = acc + wa_ref[b, c * ncoef + j] * phi_ref[j]
                out_ref[0, c] = acc

        def fwd(theta):
            # theta: (B, 2N), first N = Q_X, last N = Q_Y (same as the torch module)
            B = theta.shape[0]
            q = theta.reshape(B, 2, N).astype(jnp.float32)
            # WA[b, c, j] = sum_k Li[j, k] * Q[b, c, k]   (== torch.bmm(Li[:, :, :N], Q))
            wa = jnp.einsum('jk,bck->bcj', li_left, q,
                            precision=jax.lax.Precision.HIGHEST)   # (B, 2, N+3)
            wa_flat = wa.reshape(B, 2 * ncoef)

            out = pl.pallas_call(
                kernel,
                out_shape=jax.ShapeDtypeStruct((B, 2, Rtot, LANE), jnp.float32),
                grid_spec=pltpu.PrefetchScalarGridSpec(
                    num_scalar_prefetch=0,
                    grid=(Rtot // rt, B),
                    in_specs=[
                        pl.BlockSpec(memory_space=pltpu.MemorySpace.SMEM),    # WA scalars
                        pl.BlockSpec((ncoef, rt, LANE), lambda r, b: (0, r, 0)),
                    ],
                    out_specs=pl.BlockSpec((1, 2, rt, LANE),
                                           lambda r, b: (b, 0, r, 0)),
                ),
                compiler_params=pltpu.CompilerParams(
                    dimension_semantics=("parallel", "parallel")),
            )(wa_flat, phi)

            # drop lane padding and match torch.cat((X', Y'), dim=3) layout
            flat = out.reshape(B, 2, Rtot * LANE)[:, :, :H * W]     # (B, 2, H*W)
            return jnp.moveaxis(flat, 1, 2).reshape(B, H, W, 2)

        return jax.jit(fwd)

    def __call__(self, theta):
        return self._forward(theta)


# ----------------------------------------------------------------------------
# Pure-numpy reference (mirrors apply_transformation) for a correctness check.
# ----------------------------------------------------------------------------
def reference_forward(theta, gX, gY, Li, PX, PY, N):
    B = theta.shape[0]
    Q = theta.reshape(B, 2, N).astype(np.float32)
    WA = np.einsum('jk,bck->bcj', Li[:, :N], Q).astype(np.float32)  # (B, 2, N+3)
    d2 = (gX[..., None] - PX[None, None, :]) ** 2 + (gY[..., None] - PY[None, None, :]) ** 2
    d2 = np.where(d2 == 0.0, np.float32(1.0), d2).astype(np.float32)
    U = d2 * np.log(d2)                                              # (H, W, N)
    outs = []
    for c in range(2):
        aff = (WA[:, c, N][:, None, None]
               + WA[:, c, N + 1][:, None, None] * gX[None]
               + WA[:, c, N + 2][:, None, None] * gY[None])
        rad = np.einsum('hwk,bk->bhw', U, WA[:, c, :N])
        outs.append(aff + rad)
    return np.stack(outs, axis=-1).astype(np.float32)                # (B, H, W, 2)


if __name__ == "__main__":
    B = 2
    img_h = img_w = 16           # extended grid -> 32 x 32

    mod = StitchingTpsGridGenPallas(img_h=img_h, img_w=img_w)

    key = jax.random.PRNGKey(0)
    base = jnp.concatenate([jnp.asarray(mod.PX), jnp.asarray(mod.PY)]).astype(jnp.float32)
    theta = base[None, :] + 0.1 * jax.random.normal(key, (B, 2 * mod.N), dtype=jnp.float32)

    out = mod(theta)
    out = jax.block_until_ready(out)

    ref = reference_forward(np.asarray(theta), mod.grid_X_np, mod.grid_Y_np,
                            mod.Li, mod.PX, mod.PY, mod.N)

    assert out.shape == (B, 2 * (img_h // 2) + img_h, 2 * (img_w // 2) + img_w, 2)
    np.testing.assert_allclose(np.asarray(out), ref, rtol=1e-4, atol=5e-4)
    print("KERNEL_OK")
</pallas_src>

<mosaic_0001>
module attributes {stable_mosaic.version = 11 : i64} {
  func.func @kernel(%arg0: i32, %arg1: i32, %arg2: memref<2x24xf32, #tpu.memory_space<smem>>, %arg3: memref<12x8x128xf32, #tpu.memory_space<vmem>>, %arg4: memref<1x2x8x128xf32, #tpu.memory_space<vmem>>) attributes {dimension_semantics = [#tpu.dimension_semantics<parallel>, #tpu.dimension_semantics<parallel>], iteration_bounds = array<i64: 1, 2>, scalar_prefetch = 0 : i64, scratch_operands = 0 : i64, tpu.core_type = #tpu.core_type<tc>, window_params = [{transform_indices = @transform_0, window_bounds = array<i64: 2, 24>}, {transform_indices = @transform_1, window_bounds = array<i64: 12, 8, 128>}, {transform_indices = @transform_2, window_bounds = array<i64: 1, 2, 8, 128>}]} {
    %0 = arith.index_cast %arg1 : i32 to index
    %c0 = arith.constant 0 : index
    %1 = memref.load %arg2[%0, %c0] : memref<2x24xf32, #tpu.memory_space<smem>>
    %c0_0 = arith.constant 0 : index
    %c0_1 = arith.constant 0 : index
    %c0_2 = arith.constant 0 : index
    %2 = vector.load %arg3[%c0_0, %c0_1, %c0_2] : memref<12x8x128xf32, #tpu.memory_space<vmem>>, vector<1x8x128xf32>
    %3 = vector.shape_cast %2 : vector<1x8x128xf32> to vector<8x128xf32>
    %4 = vector.broadcast %1 : f32 to vector<8x128xf32>
    %5 = arith.mulf %4, %3 : vector<8x128xf32>
    %6 = arith.index_cast %arg1 : i32 to index
    %c1 = arith.constant 1 : index
    %7 = memref.load %arg2[%6, %c1] : memref<2x24xf32, #tpu.memory_space<smem>>
    %c1_3 = arith.constant 1 : index
    %c0_4 = arith.constant 0 : index
    %c0_5 = arith.constant 0 : index
    %8 = vector.load %arg3[%c1_3, %c0_4, %c0_5] : memref<12x8x128xf32, #tpu.memory_space<vmem>>, vector<1x8x128xf32>
    %9 = vector.shape_cast %8 : vector<1x8x128xf32> to vector<8x128xf32>
    %10 = vector.broadcast %7 : f32 to vector<8x128xf32>
    %11 = arith.mulf %10, %9 : vector<8x128xf32>
    %12 = arith.addf %5, %11 : vector<8x128xf32>
    %13 = arith.index_cast %arg1 : i32 to index
    %c2 = arith.constant 2 : index
    %14 = memref.load %arg2[%13, %c2] : memref<2x24xf32, #tpu.memory_space<smem>>
    %c2_6 = arith.constant 2 : index
    %c0_7 = arith.constant 0 : index
    %c0_8 = arith.constant 0 : index
    %15 = vector.load %arg3[%c2_6, %c0_7, %c0_8] : memref<12x8x128xf32, #tpu.memory_space<vmem>>, vector<1x8x128xf32>
    %16 = vector.shape_cast %15 : vector<1x8x128xf32> to vector<8x128xf32>
    %17 = vector.broadcast %14 : f32 to vector<8x128xf32>
    %18 = arith.mulf %17, %16 : vector<8x128xf32>
    %19 = arith.addf %12, %18 : vector<8x128xf32>
    %20 = arith.index_cast %arg1 : i32 to index
    %c3 = arith.constant 3 : index
    %21 = memref.load %arg2[%20, %c3] : memref<2x24xf32, #tpu.memory_space<smem>>
    %c3_9 = arith.constant 3 : index
    %c0_10 = arith.constant 0 : index
    %c0_11 = arith.constant 0 : index
    %22 = vector.load %arg3[%c3_9, %c0_10, %c0_11] : memref<12x8x128xf32, #tpu.memory_space<vmem>>, vector<1x8x128xf32>
    %23 = vector.shape_cast %22 : vector<1x8x128xf32> to vector<8x128xf32>
    %24 = vector.broadcast %21 : f32 to vector<8x128xf32>
    %25 = arith.mulf %24, %23 : vector<8x128xf32>
    %26 = arith.addf %19, %25 : vector<8x128xf32>
    %27 = arith.index_cast %arg1 : i32 to index
    %c4 = arith.constant 4 : index
    %28 = memref.load %arg2[%27, %c4] : memref<2x24xf32, #tpu.memory_space<smem>>
    %c4_12 = arith.constant 4 : index
    %c0_13 = arith.constant 0 : index
    %c0_14 = arith.constant 0 : index
    %29 = vector.load %arg3[%c4_12, %c0_13, %c0_14] : memref<12x8x128xf32, #tpu.memory_space<vmem>>, vector<1x8x128xf32>
    %30 = vector.shape_cast %29 : vector<1x8x128xf32> to vector<8x128xf32>
    %31 = vector.broadcast %28 : f32 to vector<8x128xf32>
    %32 = arith.mulf %31, %30 : vector<8x128xf32>
    %33 = arith.addf %26, %32 : vector<8x128xf32>
    %34 = arith.index_cast %arg1 : i32 to index
    %c5 = arith.constant 5 : index
    %35 = memref.load %arg2[%34, %c5] : memref<2x24xf32, #tpu.memory_space<smem>>
    %c5_15 = arith.constant 5 : index
    %c0_16 = arith.constant 0 : index
    %c0_17 = arith.constant 0 : index
    %36 = vector.load %arg3[%c5_15, %c0_16, %c0_17] : memref<12x8x128xf32, #tpu.memory_space<vmem>>, vector<1x8x128xf32>
    %37 = vector.shape_cast %36 : vector<1x8x128xf32> to vector<8x128xf32>
    %38 = vector.broadcast %35 : f32 to vector<8x128xf32>
    %39 = arith.mulf %38, %37 : vector<8x128xf32>
    %40 = arith.addf %33, %39 : vector<8x128xf32>
    %41 = arith.index_cast %arg1 : i32 to index
    %c6 = arith.constant 6 : index
    %42 = memref.load %arg2[%41, %c6] : memref<2x24xf32, #tpu.memory_space<smem>>
    %c6_18 = arith.constant 6 : index
    %c0_19 = arith.constant 0 : index
    %c0_20 = arith.constant 0 : index
    %43 = vector.load %arg3[%c6_18, %c0_19, %c0_20] : memref<12x8x128xf32, #tpu.memory_space<vmem>>, vector<1x8x128xf32>
    %44 = vector.shape_cast %43 : vector<1x8x128xf32> to vector<8x128xf32>
    %45 = vector.broadcast %42 : f32 to vector<8x128xf32>
    %46 = arith.mulf %45, %44 : vector<8x128xf32>
    %47 = arith.addf %40, %46 : vector<8x128xf32>
    %48 = arith.index_cast %arg1 : i32 to index
    %c7 = arith.constant 7 : index
    %49 = memref.load %arg2[%48, %c7] : memref<2x24xf32, #tpu.memory_space<smem>>
    %c7_21 = arith.constant 7 : index
    %c0_22 = arith.constant 0 : index
    %c0_23 = arith.constant 0 : index
    %50 = vector.load %arg3[%c7_21, %c0_22, %c0_23] : memref<12x8x128xf32, #tpu.memory_space<vmem>>, vector<1x8x128xf32>
    %51 = vector.shape_cast %50 : vector<1x8x128xf32> to vector<8x128xf32>
    %52 = vector.broadcast %49 : f32 to vector<8x128xf32>
    %53 = arith.mulf %52, %51 : vector<8x128xf32>
    %54 = arith.addf %47, %53 : vector<8x128xf32>
    %55 = arith.index_cast %arg1 : i32 to index
    %c8 = arith.constant 8 : index
    %56 = memref.load %arg2[%55, %c8] : memref<2x24xf32, #tpu.memory_space<smem>>
    %c8_24 = arith.constant 8 : index
    %c0_25 = arith.constant 0 : index
    %c0_26 = arith.constant 0 : index
    %57 = vector.load %arg3[%c8_24, %c0_25, %c0_26] : memref<12x8x128xf32, #tpu.memory_space<vmem>>, vector<1x8x128xf32>
    %58 = vector.shape_cast %57 : vector<1x8x128xf32> to vector<8x128xf32>
    %59 = vector.broadcast %56 : f32 to vector<8x128xf32>
    %60 = arith.mulf %59, %58 : vector<8x128xf32>
    %61 = arith.addf %54, %60 : vector<8x128xf32>
    %62 = arith.index_cast %arg1 : i32 to index
    %c9 = arith.constant 9 : index
    %63 = memref.load %arg2[%62, %c9] : memref<2x24xf32, #tpu.memory_space<smem>>
    %c9_27 = arith.constant 9 : index
    %c0_28 = arith.constant 0 : index
    %c0_29 = arith.constant 0 : index
    %64 = vector.load %arg3[%c9_27, %c0_28, %c0_29] : memref<12x8x128xf32, #tpu.memory_space<vmem>>, vector<1x8x128xf32>
    %65 = vector.shape_cast %64 : vector<1x8x128xf32> to vector<8x128xf32>
    %66 = vector.broadcast %63 : f32 to vector<8x128xf32>
    %67 = arith.mulf %66, %65 : vector<8x128xf32>
    %68 = arith.addf %61, %67 : vector<8x128xf32>
    %69 = arith.index_cast %arg1 : i32 to index
    %c10 = arith.constant 10 : index
    %70 = memref.load %arg2[%69, %c10] : memref<2x24xf32, #tpu.memory_space<smem>>
    %c10_30 = arith.constant 10 : index
    %c0_31 = arith.constant 0 : index
    %c0_32 = arith.constant 0 : index
    %71 = vector.load %arg3[%c10_30, %c0_31, %c0_32] : memref<12x8x128xf32, #tpu.memory_space<vmem>>, vector<1x8x128xf32>
    %72 = vector.shape_cast %71 : vector<1x8x128xf32> to vector<8x128xf32>
    %73 = vector.broadcast %70 : f32 to vector<8x128xf32>
    %74 = arith.mulf %73, %72 : vector<8x128xf32>
    %75 = arith.addf %68, %74 : vector<8x128xf32>
    %76 = arith.index_cast %arg1 : i32 to index
    %c11 = arith.constant 11 : index
    %77 = memref.load %arg2[%76, %c11] : memref<2x24xf32, #tpu.memory_space<smem>>
    %c11_33 = arith.constant 11 : index
    %c0_34 = arith.constant 0 : index
    %c0_35 = arith.constant 0 : index
    %78 = vector.load %arg3[%c11_33, %c0_34, %c0_35] : memref<12x8x128xf32, #tpu.memory_space<vmem>>, vector<1x8x128xf32>
    %79 = vector.shape_cast %78 : vector<1x8x128xf32> to vector<8x128xf32>
    %80 = vector.broadcast %77 : f32 to vector<8x128xf32>
    %81 = arith.mulf %80, %79 : vector<8x128xf32>
    %82 = arith.addf %75, %81 : vector<8x128xf32>
    %c0_36 = arith.constant 0 : index
    %c0_37 = arith.constant 0 : index
    %c0_38 = arith.constant 0 : index
    %c0_39 = arith.constant 0 : index
    %83 = vector.load %arg4[%c0_36, %c0_37, %c0_38, %c0_39] : memref<1x2x8x128xf32, #tpu.memory_space<vmem>>, vector<1x1x8x128xf32>
    %84 = vector.shape_cast %83 : vector<1x1x8x128xf32> to vector<8x128xf32>
    %85 = vector.shape_cast %82 : vector<8x128xf32> to vector<1x1x8x128xf32>
    tpu.vector_store %arg4[%c0_36, %c0_37, %c0_38, %c0_39], %85 {strides = array<i32>} : memref<1x2x8x128xf32, #tpu.memory_space<vmem>>, vector<1x1x8x128xf32>,
    %86 = arith.index_cast %arg1 : i32 to index
    %c12 = arith.constant 12 : index
    %87 = memref.load %arg2[%86, %c12] : memref<2x24xf32, #tpu.memory_space<smem>>
    %c0_40 = arith.constant 0 : index
    %c0_41 = arith.constant 0 : index
    %c0_42 = arith.constant 0 : index
    %88 = vector.load %arg3[%c0_40, %c0_41, %c0_42] : memref<12x8x128xf32, #tpu.memory_space<vmem>>, vector<1x8x128xf32>
    %89 = vector.shape_cast %88 : vector<1x8x128xf32> to vector<8x128xf32>
    %90 = vector.broadcast %87 : f32 to vector<8x128xf32>
    %91 = arith.mulf %90, %89 : vector<8x128xf32>
    %92 = arith.index_cast %arg1 : i32 to index
    %c13 = arith.constant 13 : index
    %93 = memref.load %arg2[%92, %c13] : memref<2x24xf32, #tpu.memory_space<smem>>
    %c1_43 = arith.constant 1 : index
    %c0_44 = arith.constant 0 : index
    %c0_45 = arith.constant 0 : index
    %94 = vector.load %arg3[%c1_43, %c0_44, %c0_45] : memref<12x8x128xf32, #tpu.memory_space<vmem>>, vector<1x8x128xf32>
    %95 = vector.shape_cast %94 : vector<1x8x128xf32> to vector<8x128xf32>
    %96 = vector.broadcast %93 : f32 to vector<8x128xf32>
    %97 = arith.mulf %96, %95 : vector<8x128xf32>
    %98 = arith.addf %91, %97 : vector<8x128xf32>
    %99 = arith.index_cast %arg1 : i32 to index
    %c14 = arith.constant 14 : index
    %100 = memref.load %arg2[%99, %c14] : memref<2x24xf32, #tpu.memory_space<smem>>
    %c2_46 = arith.constant 2 : index
    %c0_47 = arith.constant 0 : index
    %c0_48 = arith.constant 0 : index
    %101 = vector.load %arg3[%c2_46, %c0_47, %c0_48] : memref<12x8x128xf32, #tpu.memory_space<vmem>>, vector<1x8x128xf32>
    %102 = vector.shape_cast %101 : vector<1x8x128xf32> to vector<8x128xf32>
    %103 = vector.broadcast %100 : f32 to vector<8x128xf32>
    %104 = arith.mulf %103, %102 : vector<8x128xf32>
    %105 = arith.addf %98, %104 : vector<8x128xf32>
    %106 = arith.index_cast %arg1 : i32 to index
    %c15 = arith.constant 15 : index
    %107 = memref.load %arg2[%106, %c15] : memref<2x24xf32, #tpu.memory_space<smem>>
    %c3_49 = arith.constant 3 : index
    %c0_50 = arith.constant 0 : index
    %c0_51 = arith.constant 0 : index
    %108 = vector.load %arg3[%c3_49, %c0_50, %c0_51] : memref<12x8x128xf32, #tpu.memory_space<vmem>>, vector<1x8x128xf32>
    %109 = vector.shape_cast %108 : vector<1x8x128xf32> to vector<8x128xf32>
    %110 = vector.broadcast %107 : f32 to vector<8x128xf32>
    %111 = arith.mulf %110, %109 : vector<8x128xf32>
    %112 = arith.addf %105, %111 : vector<8x128xf32>
    %113 = arith.index_cast %arg1 : i32 to index
    %c16 = arith.constant 16 : index
    %114 = memref.load %arg2[%113, %c16] : memref<2x24xf32, #tpu.memory_space<smem>>
    %c4_52 = arith.constant 4 : index
    %c0_53 = arith.constant 0 : index
    %c0_54 = arith.constant 0 : index
    %115 = vector.load %arg3[%c4_52, %c0_53, %c0_54] : memref<12x8x128xf32, #tpu.memory_space<vmem>>, vector<1x8x128xf32>
    %116 = vector.shape_cast %115 : vector<1x8x128xf32> to vector<8x128xf32>
    %117 = vector.broadcast %114 : f32 to vector<8x128xf32>
    %118 = arith.mulf %117, %116 : vector<8x128xf32>
    %119 = arith.addf %112, %118 : vector<8x128xf32>
    %120 = arith.index_cast %arg1 : i32 to index
    %c17 = arith.constant 17 : index
    %121 = memref.load %arg2[%120, %c17] : memref<2x24xf32, #tpu.memory_space<smem>>
    %c5_55 = arith.constant 5 : index
    %c0_56 = arith.constant 0 : index
    %c0_57 = arith.constant 0 : index
    %122 = vector.load %arg3[%c5_55, %c0_56, %c0_57] : memref<12x8x128xf32, #tpu.memory_space<vmem>>, vector<1x8x128xf32>
    %123 = vector.shape_cast %122 : vector<1x8x128xf32> to vector<8x128xf32>
    %124 = vector.broadcast %121 : f32 to vector<8x128xf32>
    %125 = arith.mulf %124, %123 : vector<8x128xf32>
    %126 = arith.addf %119, %125 : vector<8x128xf32>
    %127 = arith.index_cast %arg1 : i32 to index
    %c18 = arith.constant 18 : index
    %128 = memref.load %arg2[%127, %c18] : memref<2x24xf32, #tpu.memory_space<smem>>
    %c6_58 = arith.constant 6 : index
    %c0_59 = arith.constant 0 : index
    %c0_60 = arith.constant 0 : index
    %129 = vector.load %arg3[%c6_58, %c0_59, %c0_60] : memref<12x8x128xf32, #tpu.memory_space<vmem>>, vector<1x8x128xf32>
    %130 = vector.shape_cast %129 : vector<1x8x128xf32> to vector<8x128xf32>
    %131 = vector.broadcast %128 : f32 to vector<8x128xf32>
    %132 = arith.mulf %131, %130 : vector<8x128xf32>
    %133 = arith.addf %126, %132 : vector<8x128xf32>
    %134 = arith.index_cast %arg1 : i32 to index
    %c19 = arith.constant 19 : index
    %135 = memref.load %arg2[%134, %c19] : memref<2x24xf32, #tpu.memory_space<smem>>
    %c7_61 = arith.constant 7 : index
    %c0_62 = arith.constant 0 : index
    %c0_63 = arith.constant 0 : index
    %136 = vector.load %arg3[%c7_61, %c0_62, %c0_63] : memref<12x8x128xf32, #tpu.memory_space<vmem>>, vector<1x8x128xf32>
    %137 = vector.shape_cast %136 : vector<1x8x128xf32> to vector<8x128xf32>
    %138 = vector.broadcast %135 : f32 to vector<8x128xf32>
    %139 = arith.mulf %138, %137 : vector<8x128xf32>
    %140 = arith.addf %133, %139 : vector<8x128xf32>
    %141 = arith.index_cast %arg1 : i32 to index
    %c20 = arith.constant 20 : index
    %142 = memref.load %arg2[%141, %c20] : memref<2x24xf32, #tpu.memory_space<smem>>
    %c8_64 = arith.constant 8 : index
    %c0_65 = arith.constant 0 : index
    %c0_66 = arith.constant 0 : index
    %143 = vector.load %arg3[%c8_64, %c0_65, %c0_66] : memref<12x8x128xf32, #tpu.memory_space<vmem>>, vector<1x8x128xf32>
    %144 = vector.shape_cast %143 : vector<1x8x128xf32> to vector<8x128xf32>
    %145 = vector.broadcast %142 : f32 to vector<8x128xf32>
    %146 = arith.mulf %145, %144 : vector<8x128xf32>
    %147 = arith.addf %140, %146 : vector<8x128xf32>
    %148 = arith.index_cast %arg1 : i32 to index
    %c21 = arith.constant 21 : index
    %149 = memref.load %arg2[%148, %c21] : memref<2x24xf32, #tpu.memory_space<smem>>
    %c9_67 = arith.constant 9 : index
    %c0_68 = arith.constant 0 : index
    %c0_69 = arith.constant 0 : index
    %150 = vector.load %arg3[%c9_67, %c0_68, %c0_69] : memref<12x8x128xf32, #tpu.memory_space<vmem>>, vector<1x8x128xf32>
    %151 = vector.shape_cast %150 : vector<1x8x128xf32> to vector<8x128xf32>
    %152 = vector.broadcast %149 : f32 to vector<8x128xf32>
    %153 = arith.mulf %152, %151 : vector<8x128xf32>
    %154 = arith.addf %147, %153 : vector<8x128xf32>
    %155 = arith.index_cast %arg1 : i32 to index
    %c22 = arith.constant 22 : index
    %156 = memref.load %arg2[%155, %c22] : memref<2x24xf32, #tpu.memory_space<smem>>
    %c10_70 = arith.constant 10 : index
    %c0_71 = arith.constant 0 : index
    %c0_72 = arith.constant 0 : index
    %157 = vector.load %arg3[%c10_70, %c0_71, %c0_72] : memref<12x8x128xf32, #tpu.memory_space<vmem>>, vector<1x8x128xf32>
    %158 = vector.shape_cast %157 : vector<1x8x128xf32> to vector<8x128xf32>
    %159 = vector.broadcast %156 : f32 to vector<8x128xf32>
    %160 = arith.mulf %159, %158 : vector<8x128xf32>
    %161 = arith.addf %154, %160 : vector<8x128xf32>
    %162 = arith.index_cast %arg1 : i32 to index
    %c23 = arith.constant 23 : index
    %163 = memref.load %arg2[%162, %c23] : memref<2x24xf32, #tpu.memory_space<smem>>
    %c11_73 = arith.constant 11 : index
    %c0_74 = arith.constant 0 : index
    %c0_75 = arith.constant 0 : index
    %164 = vector.load %arg3[%c11_73, %c0_74, %c0_75] : memref<12x8x128xf32, #tpu.memory_space<vmem>>, vector<1x8x128xf32>
    %165 = vector.shape_cast %164 : vector<1x8x128xf32> to vector<8x128xf32>
    %166 = vector.broadcast %163 : f32 to vector<8x128xf32>
    %167 = arith.mulf %166, %165 : vector<8x128xf32>
    %168 = arith.addf %161, %167 : vector<8x128xf32>
    %c0_76 = arith.constant 0 : index
    %c1_77 = arith.constant 1 : index
    %c0_78 = arith.constant 0 : index
    %c0_79 = arith.constant 0 : index
    %169 = vector.load %arg4[%c0_76, %c1_77, %c0_78, %c0_79] : memref<1x2x8x128xf32, #tpu.memory_space<vmem>>, vector<1x1x8x128xf32>
    %170 = vector.shape_cast %169 : vector<1x1x8x128xf32> to vector<8x128xf32>
    %171 = vector.shape_cast %168 : vector<8x128xf32> to vector<1x1x8x128xf32>
    tpu.vector_store %arg4[%c0_76, %c1_77, %c0_78, %c0_79], %171 {strides = array<i32>} : memref<1x2x8x128xf32, #tpu.memory_space<vmem>>, vector<1x1x8x128xf32>,
    return
  }
  func.func @transform_0(%arg0: i32, %arg1: i32) -> (i32, i32) {
    %c0_i32 = arith.constant 0 : i32
    %c0_i32_0 = arith.constant 0 : i32
    %c0_i32_1 = arith.constant 0 : i32
    return %c0_i32, %c0_i32_0 : i32, i32
  }
  func.func @transform_1(%arg0: i32, %arg1: i32) -> (i32, i32, i32) {
    %c0_i32 = arith.constant 0 : i32
    %c0_i32_0 = arith.constant 0 : i32
    %c0_i32_1 = arith.constant 0 : i32
    return %c0_i32, %arg0, %c0_i32_0 : i32, i32, i32
  }
  func.func @transform_2(%arg0: i32, %arg1: i32) -> (i32, i32, i32, i32) {
    %c0_i32 = arith.constant 0 : i32
    %c0_i32_0 = arith.constant 0 : i32
    %c0_i32_1 = arith.constant 0 : i32
    return %arg1, %c0_i32, %arg0, %c0_i32_0 : i32, i32, i32, i32
  }
}

</mosaic_0001>

<llo_original>
// kernel: fwd.1
$region0: #{fwd.1}
  #allocation0 [shape = 'u32[]', space=smem, size = 0x4, offset = 0x4, fixed_abs, tag = 'smem constant byte address 0x4 - core index']
  #allocation1 [shape = 'u32[144,128]{1,0:T(1,128)}', space=vmem, size = 0x12000, scoped, tag = 'internal scratch']
  %s0 = inlined_call_operand.vmem [shape: f32[2,24], index: 0, kind: input, shape index: {}]
  %s1 = inlined_call_operand.hbm [shape: f32[12,8,128], index: 1, kind: input, shape index: {}]
  %s2 = inlined_call_operand.vmem [shape: f32[2,2,8,128], index: 2, kind: output, shape index: {}]
  %s3 = sld [smem:[#allocation0]]
  $region49: #{fwd.1} parent=0
    _
  %s5 = ssub.s32 1, %s3
  %s6 = scalar_select 0, %s5, %s3
  $region1: #{fwd.1} parent=0
    #allocation2 [shape = 'u8[1024]{0}', space=smem, size = 0x400, scoped, tag = 'input window, operand 0, single buffered']
    #allocation3 [shape = 's32[2]{0}', space=sflag, size = 0x8, scoped, tag = 'scoped memory for fwd.1']
    #allocation4 [shape = 's32[2]{0}', space=sflag, size = 0x8, scoped, tag = 'scoped memory for fwd.1']
    #allocation5 [shape = 'u8[49152]{0}', space=vmem, size = 0xc000, scoped, tag = 'input window, operand 1, single buffered']
    %7 = vsyncpa [#allocation4], 0
    %8 = vsyncpa [#allocation3], 0
    loop: start=0, step=1, limit=4
    $region2: #{fwd.1} parent=1 // loop_pre_header
      _
    $region3: #{fwd.1} parent=1 // loop_header
      %s10 = sphi 0, %s14
      %p11 = scmp.ge.s32.totalorder %s10, 4
      %s17 = sphi 0, %s29
      %s18 = sphi 0, %s25
      %s19 = sphi 0, %s17
      %s20 = sphi 0, %s18
      %s21 = sphi 0, %s19
      %s22 = sphi 0, %s20
      %s30 = sphi 0, %s30
      %s32 = sphi 0, %s30
      %s33 = sphi 0, %s32
      %s47 = sphi 0, %s33
      %s53 = sphi 0, %s55
      %s56 = sphi 0, %s53
      %s57 = sphi 0, %s56
      %s73 = sphi 0, %s57
      %s81 = sphi 0, %s83
      %s84 = sphi 0, %s81
      %s85 = sphi 0, %s84
      %s101 = sphi 0, %s85
    $region4: #{fwd.1} parent=1 // loop_header_branch
      %13 = sbr.rel (%p11) target = $region8
    $region5: #{fwd.1} parent=1 // loop_body
      %s15 = ssub.s32 %s10, 1
      %s16 = ssub.s32 %s10, 2
      %s23 = sadd.s32 1, %s18
      %p24 = scmp.ge.s32.totalorder %s23, 2
      %s25 = scalar_select %p24, 0, %s23
      %s26 = sadd.s32 1, %s17
      %s27 = scalar_select %p24, %s26, %s17
      %p28 = scmp.ge.s32.totalorder %s27, 1
      %s29 = scalar_select %p28, 0, %s27
      %s31 = sadd.s32 %s30, 1
      %p34 = scmp.eq.s32.totalorder %s10, 1
      %p35 = scmp.ne.s32.totalorder %s30, %s32
      %p36 = scmp.eq.s32.totalorder %s10, 0
      %p37 = por %p35, %p36
      %p38 = scmp.ne.s32.totalorder %s30, %s32
      %p39 = scmp.eq.s32.totalorder %s15, 1
      %p40 = por %p38, %p39
      %p41 = scmp.ne.s32.totalorder %s32, %s33
      %p42 = scmp.eq.s32.totalorder %s15, 0
      %p43 = por %p41, %p42
      %p44 = scmp.ne.s32.totalorder %s32, %s33
      %p45 = scmp.eq.s32.totalorder %s16, 1
      %p46 = por %p44, %p45
      %p48 = scmp.ne.s32.totalorder %s33, %s47
      %p49 = scmp.eq.s32.totalorder %s16, 0
      %p50 = por %p48, %p49
      %s51 = ssub.s32 %s17, %s29
      %p52 = scmp.eq.s32.totalorder %s51, 0
      %s54 = sadd.s32 %s53, 1
      %s55 = scalar_select %p52, %s53, %s54
      %p58 = pneg %p52
      %p59 = scmp.eq.s32.totalorder %s10, 1
      %p60 = por %p58, %p59
      %p61 = scmp.ne.s32.totalorder %s53, %s56
      %p62 = scmp.eq.s32.totalorder %s10, 0
      %p63 = por %p61, %p62
      %p64 = scmp.ne.s32.totalorder %s53, %s56
      %p65 = scmp.eq.s32.totalorder %s15, 1
      %p66 = por %p64, %p65
      %p67 = scmp.ne.s32.totalorder %s56, %s57
      %p68 = scmp.eq.s32.totalorder %s15, 0
      %p69 = por %p67, %p68
      %p70 = scmp.ne.s32.totalorder %s56, %s57
      %p71 = scmp.eq.s32.totalorder %s16, 1
      %p72 = por %p70, %p71
      %p74 = scmp.ne.s32.totalorder %s57, %s73
      %p75 = scmp.eq.s32.totalorder %s16, 0
      %p76 = por %p74, %p75
      %s77 = ssub.s32 %s18, %s25
      %s78 = ssub.s32 %s17, %s29
      %s79 = sor.u32 %s77, %s78
      %p80 = scmp.eq.s32.totalorder %s79, 0
      %s82 = sadd.s32 %s81, 1
      %s83 = scalar_select %p80, %s81, %s82
      %p86 = pneg %p80
      %p87 = scmp.eq.s32.totalorder %s10, 1
      %p88 = por %p86, %p87
      %p89 = scmp.ne.s32.totalorder %s81, %s84
      %p90 = scmp.eq.s32.totalorder %s10, 0
      %p91 = por %p89, %p90
      %p92 = scmp.ne.s32.totalorder %s81, %s84
      %p93 = scmp.eq.s32.totalorder %s15, 1
      %p94 = por %p92, %p93
      %p95 = scmp.ne.s32.totalorder %s84, %s85
      %p96 = scmp.eq.s32.totalorder %s15, 0
      %p97 = por %p95, %p96
      %p98 = scmp.ne.s32.totalorder %s84, %s85
      %p99 = scmp.eq.s32.totalorder %s16, 1
      %p100 = por %p98, %p99
      %p102 = scmp.ne.s32.totalorder %s85, %s101
      %p103 = scmp.eq.s32.totalorder %s16, 0
      %p104 = por %p102, %p103
      %p105 = scmp.le.s32.totalorder 1, %s10
      %p106 = scmp.lt.s32.totalorder %s10, 3
      %p107 = pnand %p105, %p106
      %p108 = pneg %p107
      // Predicated region
      $region9: #{fwd.1} parent=5 // pred_check
        _
      $region10: #{fwd.1} parent=5 // pred_check_branch
        %110 = sbr.rel (%p107) target = $region12
      $region11: #{fwd.1} parent=5 // pred_region
        %s111 = ssub.s32 %s10, 1
        // Predicated region
        $region13: #{fwd.1} parent=11 // pred_check
          %p112 = pneg %p43
        $region14: #{fwd.1} parent=11 // pred_check_branch
          %114 = sbr.rel (%p112) target = $region16
        $region15: #{fwd.1} parent=11 // pred_region
          %s116 = ssub.s32 32, 32
          %117 = vsyncadd [#allocation4], %s116
          %s119 = sshll.u32 %s0, 4
          %s120 = int_to_ptr.vmem [resolvable:$true] %s119
          %122 = dma.vmem_to_smem %s120, 32, [#allocation2], [#allocation4]
        $region16: #{fwd.1} parent=11 // pred_fallthru
          _
        // Predicated region
        $region17: #{fwd.1} parent=11 // pred_check
          %p123 = pneg %p69
        $region18: #{fwd.1} parent=11 // pred_check_branch
          %125 = sbr.rel (%p123) target = $region20
        $region19: #{fwd.1} parent=11 // pred_region
          %s127 = ssub.s32 1536, 1536
          %128 = vsyncadd [#allocation3], %s127
          %s129 = smul.addr %s19, 128
          %s130 = scalar_lea.hbm %s1, %s129
          %s131 = sshll.u32 [#allocation5], 4
          %s132 = int_to_ptr.vmem [resolvable:$true] %s131
          %137 = dma.hbm_to_vmem [thread:$0]  %s130, 1536, %s132, [#allocation3], 128, 128, 8
        $region20: #{fwd.1} parent=11 // pred_fallthru
          _
      $region12: #{fwd.1} parent=5 // pred_fallthru
        _
      %p138 = scmp.lt.s32.totalorder %s10, 2
      // Predicated region
      $region21: #{fwd.1} parent=5 // pred_check
        %p139 = pneg %p138
      $region22: #{fwd.1} parent=5 // pred_check_branch
        %141 = sbr.rel (%p139) target = $region24
      $region23: #{fwd.1} parent=5 // pred_region
        _
      $region24: #{fwd.1} parent=5 // pred_fallthru
        _
      %p142 = scmp.le.s32.totalorder 1, %s10
      %p143 = scmp.lt.s32.totalorder %s10, 3
      %p144 = pnand %p142, %p143
      %p145 = pneg %p144
      // Predicated region
      $region25: #{fwd.1} parent=5 // pred_check
        _
      $region26: #{fwd.1} parent=5 // pred_check_branch
        %147 = sbr.rel (%p144) target = $region28
      $region27: #{fwd.1} parent=5 // pred_region
        %s148 = ssub.s32 %s10, 1
        // Predicated region
        $region29: #{fwd.1} parent=27 // pred_check
          %p149 = pneg %p43
        $region30: #{fwd.1} parent=27 // pred_check_branch
          %151 = sbr.rel (%p149) target = $region32
        $region31: #{fwd.1} parent=27 // pred_region
          %152 = dma.done [#allocation4], 32
        $region32: #{fwd.1} parent=27 // pred_fallthru
          _
        // Predicated region
        $region33: #{fwd.1} parent=27 // pred_check
          %p153 = pneg %p69
        $region34: #{fwd.1} parent=27 // pred_check_branch
          %155 = sbr.rel (%p153) target = $region36
        $region35: #{fwd.1} parent=27 // pred_region
          %156 = dma.done [#allocation3], 1536
        $region36: #{fwd.1} parent=27 // pred_fallthru
          _
        %157 = sfence
        %p158 = pneg %p43
        %p159 = pneg %p40
        %p160 = pneg %p69
        %p161 = pneg %p66
        %p162 = pneg %p97
        %p163 = pneg %p94
        %p164 = scmp.lt.s32.totalorder %s20, 1
        %s165 = scalar_select %p164, %s20, 1
        %p166 = scmp.lt.s32.totalorder %s19, 0
        %s167 = scalar_select %p166, %s19, 0
        %s168 = smul.addr %s165, 2
        %s169 = sadd.s32 %s167, %s168
        %s170 = smul.addr %s169, 8
        %s171 = scalar_lea.vmem %s2, %s170
        %p172 = scmp.lt.s32.totalorder %s20, 1
        %s173 = scalar_select %p172, %s20, 1
        %p174 = scmp.lt.s32.totalorder %s19, 0
        %s175 = scalar_select %p174, %s19, 0
        %s176 = smul.addr %s173, 2
        %s177 = sadd.s32 %s175, %s176
        %s178 = smul.addr %s177, 8
        %s179 = scalar_lea.vmem %s2, %s178
        %s180 = smul.u32 %s20, 128
        %s181 = sld [smem:[#allocation2 + %s180]]
        %v182 = vld [vmem:[#allocation5] sm:$0xff]
        %v183 = vstv %s181
        %v184 = vmul.f32 %v183, %v182
        %s185 = sadd.s32 %s180, 1
        %s186 = sld [smem:[#allocation2 + %s185]]
        %s187 = scalar_lea.vmem [#allocation5], 8
        %v188 = vld [vmem:[%s187] sm:$0xff]
        %v189 = vstv %s186
        %v190 = vmul.f32 %v189, %v188
        %v191 = vadd.f32 %v184, %v190
        %s192 = sadd.s32 %s180, 2
        %s193 = sld [smem:[#allocation2 + %s192]]
        %s194 = scalar_lea.vmem [#allocation5], 16
        %v195 = vld [vmem:[%s194] sm:$0xff]
        %v196 = vstv %s193
        %v197 = vmul.f32 %v196, %v195
        %v198 = vadd.f32 %v191, %v197
        %s199 = sadd.s32 %s180, 3
        %s200 = sld [smem:[#allocation2 + %s199]]
        %s201 = scalar_lea.vmem [#allocation5], 24
        %v202 = vld [vmem:[%s201] sm:$0xff]
        %v203 = vstv %s200
        %v204 = vmul.f32 %v203, %v202
        %v205 = vadd.f32 %v198, %v204
        %s206 = sadd.s32 %s180, 4
        %s207 = sld [smem:[#allocation2 + %s206]]
        %s208 = scalar_lea.vmem [#allocation5], 32
        %v209 = vld [vmem:[%s208] sm:$0xff]
        %v210 = vstv %s207
        %v211 = vmul.f32 %v210, %v209
        %v212 = vadd.f32 %v205, %v211
        %s213 = sadd.s32 %s180, 5
        %s214 = sld [smem:[#allocation2 + %s213]]
        %s215 = scalar_lea.vmem [#allocation5], 40
        %v216 = vld [vmem:[%s215] sm:$0xff]
        %v217 = vstv %s214
        %v218 = vmul.f32 %v217, %v216
        %v219 = vadd.f32 %v212, %v218
        %s220 = sadd.s32 %s180, 6
        %s221 = sld [smem:[#allocation2 + %s220]]
        %s222 = scalar_lea.vmem [#allocation5], 48
        %v223 = vld [vmem:[%s222] sm:$0xff]
        %v224 = vstv %s221
        %v225 = vmul.f32 %v224, %v223
        %v226 = vadd.f32 %v219, %v225
        %s227 = sadd.s32 %s180, 7
        %s228 = sld [smem:[#allocation2 + %s227]]
        %s229 = scalar_lea.vmem [#allocation5], 56
        %v230 = vld [vmem:[%s229] sm:$0xff]
        %v231 = vstv %s228
        %v232 = vmul.f32 %v231, %v230
        %v233 = vadd.f32 %v226, %v232
        %s234 = sadd.s32 %s180, 8
        %s235 = sld [smem:[#allocation2 + %s234]]
        %s236 = scalar_lea.vmem [#allocation5], 64
        %v237 = vld [vmem:[%s236] sm:$0xff]
        %v238 = vstv %s235
        %v239 = vmul.f32 %v238, %v237
        %v240 = vadd.f32 %v233, %v239
        %s241 = sadd.s32 %s180, 9
        %s242 = sld [smem:[#allocation2 + %s241]]
        %s243 = scalar_lea.vmem [#allocation5], 72
        %v244 = vld [vmem:[%s243] sm:$0xff]
        %v245 = vstv %s242
        %v246 = vmul.f32 %v245, %v244
        %v247 = vadd.f32 %v240, %v246
        %s248 = sadd.s32 %s180, 10
        %s249 = sld [smem:[#allocation2 + %s248]]
        %s250 = scalar_lea.vmem [#allocation5], 80
        %v251 = vld [vmem:[%s250] sm:$0xff]
        %v252 = vstv %s249
        %v253 = vmul.f32 %v252, %v251
        %v254 = vadd.f32 %v247, %v253
        %s255 = sadd.s32 %s180, 11
        %s256 = sld [smem:[#allocation2 + %s255]]
        %s257 = scalar_lea.vmem [#allocation5], 88
        %v258 = vld [vmem:[%s257] sm:$0xff]
        %v259 = vstv %s256
        %v260 = vmul.f32 %v259, %v258
        %v261 = vadd.f32 %v254, %v260
        %262 = vst [vmem:[%s179] sm:$0xff] %v261
        %s263 = sadd.s32 %s180, 12
        %s264 = sld [smem:[#allocation2 + %s263]]
        %v265 = vld [vmem:[#allocation5] sm:$0xff]
        %v266 = vstv %s264
        %v267 = vmul.f32 %v266, %v265
        %s268 = sadd.s32 %s180, 13
        %s269 = sld [smem:[#allocation2 + %s268]]
        %v270 = vld [vmem:[%s187] sm:$0xff]
        %v271 = vstv %s269
        %v272 = vmul.f32 %v271, %v270
        %v273 = vadd.f32 %v267, %v272
        %s274 = sadd.s32 %s180, 14
        %s275 = sld [smem:[#allocation2 + %s274]]
        %v276 = vld [vmem:[%s194] sm:$0xff]
        %v277 = vstv %s275
        %v278 = vmul.f32 %v277, %v276
        %v279 = vadd.f32 %v273, %v278
        %s280 = sadd.s32 %s180, 15
        %s281 = sld [smem:[#allocation2 + %s280]]
        %v282 = vld [vmem:[%s201] sm:$0xff]
        %v283 = vstv %s281
        %v284 = vmul.f32 %v283, %v282
        %v285 = vadd.f32 %v279, %v284
        %s286 = sadd.s32 %s180, 16
        %s287 = sld [smem:[#allocation2 + %s286]]
        %v288 = vld [vmem:[%s208] sm:$0xff]
        %v289 = vstv %s287
        %v290 = vmul.f32 %v289, %v288
        %v291 = vadd.f32 %v285, %v290
        %s292 = sadd.s32 %s180, 17
        %s293 = sld [smem:[#allocation2 + %s292]]
        %v294 = vld [vmem:[%s215] sm:$0xff]
        %v295 = vstv %s293
        %v296 = vmul.f32 %v295, %v294
        %v297 = vadd.f32 %v291, %v296
        %s298 = sadd.s32 %s180, 18
        %s299 = sld [smem:[#allocation2 + %s298]]
        %v300 = vld [vmem:[%s222] sm:$0xff]
        %v301 = vstv %s299
        %v302 = vmul.f32 %v301, %v300
        %v303 = vadd.f32 %v297, %v302
        %s304 = sadd.s32 %s180, 19
        %s305 = sld [smem:[#allocation2 + %s304]]
        %v306 = vld [vmem:[%s229] sm:$0xff]
        %v307 = vstv %s305
        %v308 = vmul.f32 %v307, %v306
        %v309 = vadd.f32 %v303, %v308
        %s310 = sadd.s32 %s180, 20
        %s311 = sld [smem:[#allocation2 + %s310]]
        %v312 = vld [vmem:[%s236] sm:$0xff]
        %v313 = vstv %s311
        %v314 = vmul.f32 %v313, %v312
        %v315 = vadd.f32 %v309, %v314
        %s316 = sadd.s32 %s180, 21
        %s317 = sld [smem:[#allocation2 + %s316]]
        %v318 = vld [vmem:[%s243] sm:$0xff]
        %v319 = vstv %s317
        %v320 = vmul.f32 %v319, %v318
        %v321 = vadd.f32 %v315, %v320
        %s322 = sadd.s32 %s180, 22
        %s323 = sld [smem:[#allocation2 + %s322]]
        %v324 = vld [vmem:[%s250] sm:$0xff]
        %v325 = vstv %s323
        %v326 = vmul.f32 %v325, %v324
        %v327 = vadd.f32 %v321, %v326
        %s328 = sadd.s32 %s180, 23
        %s329 = sld [smem:[#allocation2 + %s328]]
        %v330 = vld [vmem:[%s257] sm:$0xff]
        %v331 = vstv %s329
        %v332 = vmul.f32 %v331, %v330
        %v333 = vadd.f32 %v327, %v332
        %s334 = scalar_lea.vmem %s179, 8
        %335 = vst [vmem:[%s334] sm:$0xff] %v333
        %p336 = scmp.lt.s32.totalorder %s20, 1
        %s337 = scalar_select %p336, %s20, 1
        %p338 = scmp.lt.s32.totalorder %s19, 0
        %s339 = scalar_select %p338, %s19, 0
        %s340 = smul.addr %s337, 2
        %s341 = sadd.s32 %s339, %s340
        %s342 = smul.addr %s341, 8
        %s343 = scalar_lea.vmem %s2, %s342
        // Predicated region
        $region37: #{fwd.1} parent=27 // pred_check
          %p344 = pneg %p94
        $region38: #{fwd.1} parent=27 // pred_check_branch
          %346 = sbr.rel (%p344) target = $region40
        $region39: #{fwd.1} parent=27 // pred_region
          _
        $region40: #{fwd.1} parent=27 // pred_fallthru
          _
      $region28: #{fwd.1} parent=5 // pred_fallthru
        _
      %p347 = scmp.le.s32.totalorder 2, %s10
      // Predicated region
      $region41: #{fwd.1} parent=5 // pred_check
        %p348 = pneg %p347
      $region42: #{fwd.1} parent=5 // pred_check_branch
        %350 = sbr.rel (%p348) target = $region44
      $region43: #{fwd.1} parent=5 // pred_region
        %s351 = ssub.s32 %s10, 2
        // Predicated region
        $region45: #{fwd.1} parent=43 // pred_check
          %p352 = pneg %p100
        $region46: #{fwd.1} parent=43 // pred_check_branch
          %354 = sbr.rel (%p352) target = $region48
        $region47: #{fwd.1} parent=43 // pred_region
          %p355 = scmp.lt.s32.totalorder %s22, 1
          %s356 = scalar_select %p355, %s22, 1
          %p357 = scmp.lt.s32.totalorder %s21, 0
          %s358 = scalar_select %p357, %s21, 0
          %s359 = smul.addr %s356, 2
          %s360 = sadd.s32 %s358, %s359
          %s361 = smul.addr %s360, 8
          %s362 = scalar_lea.vmem %s2, %s361
        $region48: #{fwd.1} parent=43 // pred_fallthru
          _
      $region44: #{fwd.1} parent=5 // pred_fallthru
        _
    $region6: #{fwd.1} parent=1 // loop_footer
      %s14 = sadd.s32 1, %s10
    $region7: #{fwd.1} parent=1 // loop_footer_branch
      %9 = sbr.rel target = $region3
    $region8: #{fwd.1} parent=1 // loop_exit
      _
    %363 = vsyncpa [#allocation3], 1
    %s364 = scalar_lea.sflag [#allocation3], 1
    %365 = vsyncpa %s364, 1
    %366 = vsyncpa [#allocation4], 1
    %s367 = scalar_lea.sflag [#allocation4], 1
    %368 = vsyncpa %s367, 1

</llo_original>
